<compile_context>
chip_gen: v5e
topology: v5e:2x2
jax: 0.10.0
libtpu: 0.0.40
codegen_flags: <defaults>
</compile_context>

<pallas_src>
import functools

import jax
import jax.numpy as jnp
from jax.experimental import pallas as pl
from jax.experimental.pallas import tpu as pltpu

LANE = 128
SUBLANE = 8
MAX_TILE_ROWS = 4096   # (4096, 128) f32 tile = 2 MiB per stream per buffer


def _round_up(x, m):
    return ((x + m - 1) // m) * m


def _make_kernel(w0, w1, has_around, tile_rows, rows_valid, n, needs_row_mask):
    sub_blocks = tile_rows // SUBLANE
    wsum = w0 + (w1 if has_around else 0.0)

    def kernel(*refs):
        if has_around:
            o_ref, t_ref, a_ref, out_ref = refs
        else:
            o_ref, t_ref, out_ref = refs

        step = pl.program_id(0)

        # Zero the VMEM-resident (8,128) accumulator block on the first step.
        @pl.when(step == 0)
        def _():
            out_ref[...] = jnp.zeros_like(out_ref)

        o = o_ref[...].astype(jnp.float32)
        t = t_ref[...].astype(jnp.float32)

        # PyTorch BCE clamps both log terms at -100.
        log_o = jnp.maximum(jnp.log(o), -100.0)
        log_1mo = jnp.maximum(jnp.log(1.0 - o), -100.0)

        # w0*bce(o,t) + w1*bce(o,a) = -(s*log_o + (wsum-s)*log_1mo), s = w0*t + w1*a
        if has_around:
            s = w0 * t + w1 * a_ref[...].astype(jnp.float32)
        else:
            s = w0 * t
        contrib = -(s * log_o + (wsum - s) * log_1mo)

        if needs_row_mask:
            # Rows past rows_valid in the last (partial) tile hold garbage; use a
            # select (not a multiplicative mask) so NaN/Inf there cannot leak in.
            row_ids = (jax.lax.broadcasted_iota(jnp.int32, (tile_rows, LANE), 0)
                       + step * tile_rows)
            contrib = jnp.where(row_ids < rows_valid, contrib, 0.0)

        # Per-vreg partial sums only (pure VPU adds across sublane-tiles);
        # the cross-lane/XLU reduce is deferred to the one-time epilogue below.
        partial = jnp.sum(contrib.reshape(sub_blocks, SUBLANE, LANE), axis=0)
        out_ref[...] += partial

        # Epilogue: fold the cross-lane reduce and the 1/n mean scale in-kernel.
        @pl.when(step == pl.num_programs(0) - 1)
        def _():
            total = jnp.sum(out_ref[...]) / n
            out_ref[...] = jnp.full((SUBLANE, LANE), total, dtype=jnp.float32)

    return kernel


@functools.partial(jax.jit, static_argnames=("alpha", "has_around"))
def _voxel_loss_impl(outputs, targets, around, alpha, has_around):
    n = outputs.size
    w0 = float(1.0 - alpha)
    w1 = float(alpha)

    rows_valid = -(-n // LANE)            # ceil(n / 128)
    lane_pad = rows_valid * LANE - n      # 0..127 elements

    # Block row count is a multiple of 16 so the block stays sublane-aligned for
    # both f32 and bf16 input streams.  The last tile may be partial; garbage
    # rows are masked in-kernel.
    tile_rows = min(MAX_TILE_ROWS, _round_up(rows_valid, 2 * SUBLANE))
    steps = -(-rows_valid // tile_rows)
    needs_row_mask = steps * tile_rows != rows_valid

    def prep(x):
        flat = jnp.ravel(x)
        if lane_pad > 0:
            # TODO(synk): this sub-128-element pad still costs one read+write pass
            # over the array; only hit when n % 128 != 0.  Pad value 1.0 makes
            # BCE(o=1, t=1) contribute exactly 0, so no extra mask stream needed.
            flat = jnp.pad(flat, (0, lane_pad), constant_values=1)
        # When n % 128 == 0 this reshape is a pure bitcast: zero extra HBM traffic.
        return flat.reshape(rows_valid, LANE)

    args = [prep(outputs), prep(targets)]
    if has_around:
        args.append(prep(around))

    if steps >= 3:
        # Deeper input pipelining to hide DMA jitter on the pure streaming path.
        in_spec = pl.BlockSpec((tile_rows, LANE), lambda i: (i, 0),
                               pipeline_mode=pl.Buffered(3))
    else:
        in_spec = pl.BlockSpec((tile_rows, LANE), lambda i: (i, 0))

    kernel = _make_kernel(w0, w1, has_around, tile_rows, rows_valid, n,
                          needs_row_mask)

    # Kernel writes the final mean loss broadcast over a single (8,128) block.
    result = pl.pallas_call(
        kernel,
        out_shape=jax.ShapeDtypeStruct((SUBLANE, LANE), jnp.float32),
        grid_spec=pltpu.PrefetchScalarGridSpec(
            num_scalar_prefetch=0,
            grid=(steps,),
            in_specs=[in_spec] * len(args),
            out_specs=pl.BlockSpec((SUBLANE, LANE), lambda i: (0, 0)),
        ),
        compiler_params=pltpu.CompilerParams(
            dimension_semantics=("arbitrary",),   # reduction axis, resident output
            vmem_limit_bytes=32 * 1024 * 1024,
        ),
    )(*args)

    return result[0, 0]


class VoxelLoss:
    """JAX/Pallas port of the PyTorch VoxelLoss module."""

    def __init__(self, alpha=0.25):
        self.alpha = float(alpha)

    def __call__(self, outputs, targets, around=None):
        has_around = around is not None
        return _voxel_loss_impl(outputs, targets,
                                around if has_around else None,
                                self.alpha, has_around)


def _reference(outputs, targets, around, alpha):
    o = outputs.reshape(-1).astype(jnp.float32)
    t = targets.reshape(-1).astype(jnp.float32)
    log_o = jnp.maximum(jnp.log(o), -100.0)
    log_1mo = jnp.maximum(jnp.log(1.0 - o), -100.0)
    bce_t = jnp.mean(-(t * log_o + (1.0 - t) * log_1mo))
    loss = (1.0 - alpha) * bce_t
    if around is not None:
        a = around.reshape(-1).astype(jnp.float32)
        bce_a = jnp.mean(-(a * log_o + (1.0 - a) * log_1mo))
        loss = loss + alpha * bce_a
    return loss


if __name__ == "__main__":
    loss_fn = VoxelLoss(alpha=0.25)

    def run_case(key, shape, with_around, rtol=1e-5):
        ka, kb, kc = jax.random.split(key, 3)
        outputs = jax.nn.sigmoid(jax.random.normal(ka, shape, jnp.float32))
        targets = (jax.random.uniform(kb, shape) > 0.5).astype(jnp.float32)
        around = jax.random.uniform(kc, shape, jnp.float32) if with_around else None
        got = loss_fn(outputs, targets, around)
        jax.block_until_ready(got)
        want = _reference(outputs, targets, around, 0.25)
        assert jnp.allclose(got, want, rtol=rtol, atol=1e-6), \
            (shape, with_around, got, want)

    keys = jax.random.split(jax.random.PRNGKey(0), 4)

    # Small voxel-style NCHW input, with and without `around`.
    run_case(keys[0], (2, 4, 16, 16), with_around=False)
    run_case(keys[1], (2, 4, 16, 16), with_around=True)
    # Ragged size (n % 128 != 0): exercises the minimal lane pad + in-kernel row mask.
    run_case(keys[2], (2, 3, 7, 11), with_around=True)
    # Multi-tile size: exercises multi-step accumulation, Buffered(3) pipelining
    # and the partial-last-tile mask.
    run_case(keys[3], (2, 4, 64, 64, 36), with_around=True, rtol=1e-4)

    print("KERNEL_OK")
</pallas_src>

<mosaic_0001>
module attributes {stable_mosaic.version = 11 : i64} {
  func.func @kernel(%arg0: i32, %arg1: memref<16x128xf32, #tpu.memory_space<vmem>>, %arg2: memref<16x128xf32, #tpu.memory_space<vmem>>, %arg3: memref<8x128xf32, #tpu.memory_space<vmem>>) attributes {dimension_semantics = [#tpu.dimension_semantics<arbitrary>], iteration_bounds = array<i64: 1>, scalar_prefetch = 0 : i64, scratch_operands = 0 : i64, tpu.core_type = #tpu.core_type<tc>, window_params = [{transform_indices = @transform_0, window_bounds = array<i64: 16, 128>}, {transform_indices = @transform_1, window_bounds = array<i64: 16, 128>}, {pipeline_mode = #tpu.pipeline_mode<synchronous>, transform_indices = @transform_2, window_bounds = array<i64: 8, 128>}]} {
    %c0_i32 = arith.constant 0 : i32
    %0 = arith.cmpi eq, %arg0, %c0_i32 : i32
    %1 = arith.extui %0 : i1 to i32
    %c0_i32_0 = arith.constant 0 : i32
    %2 = arith.cmpi ne, %1, %c0_i32_0 : i32
    scf.if %2 {
      %cst_16 = arith.constant 0.000000e+00 : f32
      %30 = vector.broadcast %cst_16 : f32 to vector<8x128xf32>
      %c0_17 = arith.constant 0 : index
      %c0_18 = arith.constant 0 : index
      %31 = vector.load %arg3[%c0_17, %c0_18] : memref<8x128xf32, #tpu.memory_space<vmem>>, vector<8x128xf32>
      tpu.vector_store %arg3[%c0_17, %c0_18], %30 {strides = array<i32>} : memref<8x128xf32, #tpu.memory_space<vmem>>, vector<8x128xf32>,
    } else {
    }
    %c0 = arith.constant 0 : index
    %c0_1 = arith.constant 0 : index
    %3 = vector.load %arg1[%c0, %c0_1] : memref<16x128xf32, #tpu.memory_space<vmem>>, vector<16x128xf32>
    %c0_2 = arith.constant 0 : index
    %c0_3 = arith.constant 0 : index
    %4 = vector.load %arg2[%c0_2, %c0_3] : memref<16x128xf32, #tpu.memory_space<vmem>>, vector<16x128xf32>
    %5 = math.log %3 : vector<16x128xf32>
    %cst = arith.constant -1.000000e+02 : f32
    %6 = vector.broadcast %cst : f32 to vector<16x128xf32>
    %7 = arith.maximumf %5, %6 : vector<16x128xf32>
    %cst_4 = arith.constant 1.000000e+00 : f32
    %8 = vector.broadcast %cst_4 : f32 to vector<16x128xf32>
    %9 = arith.subf %8, %3 : vector<16x128xf32>
    %10 = math.log %9 : vector<16x128xf32>
    %cst_5 = arith.constant -1.000000e+02 : f32
    %11 = vector.broadcast %cst_5 : f32 to vector<16x128xf32>
    %12 = arith.maximumf %10, %11 : vector<16x128xf32>
    %cst_6 = arith.constant 7.500000e-01 : f32
    %13 = vector.broadcast %cst_6 : f32 to vector<16x128xf32>
    %14 = arith.mulf %13, %4 : vector<16x128xf32>
    %15 = arith.mulf %14, %7 : vector<16x128xf32>
    %cst_7 = arith.constant 7.500000e-01 : f32
    %16 = vector.broadcast %cst_7 : f32 to vector<16x128xf32>
    %17 = arith.subf %16, %14 : vector<16x128xf32>
    %18 = arith.mulf %17, %12 : vector<16x128xf32>
    %19 = arith.addf %15, %18 : vector<16x128xf32>
    %cst_8 = arith.constant 0.000000e+00 : f32
    %20 = vector.broadcast %cst_8 : f32 to vector<16x128xf32>
    %21 = arith.subf %20, %19 : vector<16x128xf32>
    %22 = vector.shape_cast %21 : vector<16x128xf32> to vector<2x8x128xf32>
    %cst_9 = arith.constant dense<0.000000e+00> : vector<8x128xf32>
    %23 = vector.multi_reduction <add>, %22, %cst_9 [0] : vector<2x8x128xf32> to vector<8x128xf32>
    %c0_10 = arith.constant 0 : index
    %c0_11 = arith.constant 0 : index
    %24 = vector.load %arg3[%c0_10, %c0_11] : memref<8x128xf32, #tpu.memory_space<vmem>>, vector<8x128xf32>
    %25 = arith.addf %24, %23 : vector<8x128xf32>
    %c0_12 = arith.constant 0 : index
    %c0_13 = arith.constant 0 : index
    %26 = vector.load %arg3[%c0_12, %c0_13] : memref<8x128xf32, #tpu.memory_space<vmem>>, vector<8x128xf32>
    tpu.vector_store %arg3[%c0_12, %c0_13], %25 {strides = array<i32>} : memref<8x128xf32, #tpu.memory_space<vmem>>, vector<8x128xf32>,
    %c0_i32_14 = arith.constant 0 : i32
    %27 = arith.cmpi eq, %arg0, %c0_i32_14 : i32
    %28 = arith.extui %27 : i1 to i32
    %c0_i32_15 = arith.constant 0 : i32
    %29 = arith.cmpi ne, %28, %c0_i32_15 : i32
    scf.if %29 {
      %c0_16 = arith.constant 0 : index
      %c0_17 = arith.constant 0 : index
      %30 = vector.load %arg3[%c0_16, %c0_17] : memref<8x128xf32, #tpu.memory_space<vmem>>, vector<8x128xf32>
      %31 = vector.shape_cast %30 : vector<8x128xf32> to vector<1x8x128xf32>
      %cst_18 = arith.constant dense<0.000000e+00> : vector<1xf32>
      %32 = vector.multi_reduction <add>, %31, %cst_18 [1, 2] : vector<1x8x128xf32> to vector<1xf32>
      %33 = vector.shape_cast %32 : vector<1xf32> to vector<1x1x1xf32>
      %34 = vector.extract %33[0, 0, 0] : f32 from vector<1x1x1xf32>
      %cst_19 = arith.constant 2.048000e+03 : f32
      %35 = arith.divf %34, %cst_19 : f32
      %36 = vector.broadcast %35 : f32 to vector<8x128xf32>
      %c0_20 = arith.constant 0 : index
      %c0_21 = arith.constant 0 : index
      %37 = vector.load %arg3[%c0_20, %c0_21] : memref<8x128xf32, #tpu.memory_space<vmem>>, vector<8x128xf32>
      tpu.vector_store %arg3[%c0_20, %c0_21], %36 {strides = array<i32>} : memref<8x128xf32, #tpu.memory_space<vmem>>, vector<8x128xf32>,
    } else {
    }
    return
  }
  func.func @transform_0(%arg0: i32) -> (i32, i32) {
    %c0_i32 = arith.constant 0 : i32
    %c0_i32_0 = arith.constant 0 : i32
    return %arg0, %c0_i32 : i32, i32
  }
  func.func @transform_1(%arg0: i32) -> (i32, i32) {
    %c0_i32 = arith.constant 0 : i32
    %c0_i32_0 = arith.constant 0 : i32
    return %arg0, %c0_i32 : i32, i32
  }
  func.func @transform_2(%arg0: i32) -> (i32, i32) {
    %c0_i32 = arith.constant 0 : i32
    %c0_i32_0 = arith.constant 0 : i32
    %c0_i32_1 = arith.constant 0 : i32
    return %c0_i32, %c0_i32_0 : i32, i32
  }
}

</mosaic_0001>

<llo_original>
// kernel: _voxel_loss_impl.1
$region0: #{_voxel_loss_impl.1}
  #allocation0 [shape = 'u32[]', space=smem, size = 0x4, offset = 0x4, fixed_abs, tag = 'smem constant byte address 0x4 - core index']
  #allocation1 [shape = 'u32[72,128]{1,0:T(1,128)}', space=vmem, size = 0x9000, scoped, tag = 'internal scratch']
  %s0 = inlined_call_operand.vmem [shape: f32[16,128], index: 0, kind: input, shape index: {}]
  %s1 = inlined_call_operand.vmem [shape: f32[16,128], index: 1, kind: input, shape index: {}]
  %s2 = inlined_call_operand.vmem [shape: f32[8,128], index: 2, kind: output, shape index: {}]
  %s3 = sld [smem:[#allocation0]]
  $region26: #{_voxel_loss_impl.1} parent=0
    _
  %s5 = ssub.s32 1, %s3
  %s6 = scalar_select 0, %s5, %s3
  // Predicated region
  $region2: #{_voxel_loss_impl.1} parent=0 // pred_check
    _
  $region3: #{_voxel_loss_impl.1} parent=0 // pred_check_branch
    %8 = sbr.rel (0) target = $region5
  $region4: #{_voxel_loss_impl.1} parent=0 // pred_region
    _
  $region5: #{_voxel_loss_impl.1} parent=0 // pred_fallthru
    _
  // Predicated region
  $region6: #{_voxel_loss_impl.1} parent=0 // pred_check
    _
  $region7: #{_voxel_loss_impl.1} parent=0 // pred_check_branch
    %10 = sbr.rel (0) target = $region9
  $region8: #{_voxel_loss_impl.1} parent=0 // pred_region
    _
  $region9: #{_voxel_loss_impl.1} parent=0 // pred_fallthru
    _
  %p11 = scmp.eq.s32.totalorder 0, 0
  // Predicated region
  $region10: #{_voxel_loss_impl.1} parent=0 // pred_check
    %p12 = pneg %p11
  $region11: #{_voxel_loss_impl.1} parent=0 // pred_check_branch
    %14 = sbr.rel (%p12) target = $region13
  $region12: #{_voxel_loss_impl.1} parent=0 // pred_region
    %15 = vst [vmem:[%s2] sm:$0xff] 0.0
  $region13: #{_voxel_loss_impl.1} parent=0 // pred_fallthru
    _
  %v16 = vld [vmem:[%s0] sm:$0xff]
  %v17 = vld [vmem:[%s0 + $0x8] sm:$0xff]
  %v18 = vld [vmem:[%s1] sm:$0xff]
  %v19 = vld [vmem:[%s1 + $0x8] sm:$0xff]
  %v20 = vlog2.pop %v16
  %v21 = vmul.f32 %v20, 0.6931472
  %v22 = vlog2.pop %v17
  %v23 = vmul.f32 %v22, 0.6931472
  %v24 = vmax.f32 %v21, -100.0
  %v25 = vmax.f32 %v23, -100.0
  %v26 = vsub.f32 1.0, %v16
  %v27 = vsub.f32 1.0, %v17
  %v28 = vlog2.pop %v26
  %v29 = vmul.f32 %v28, 0.6931472
  %v30 = vlog2.pop %v27
  %v31 = vmul.f32 %v30, 0.6931472
  %v32 = vmax.f32 %v29, -100.0
  %v33 = vmax.f32 %v31, -100.0
  %v34 = vmul.f32 %v18, 0.75
  %v35 = vmul.f32 %v19, 0.75
  %v36 = vmul.f32 %v34, %v24
  %v37 = vmul.f32 %v35, %v25
  %v38 = vsub.f32 0.75, %v34
  %v39 = vsub.f32 0.75, %v35
  %v40 = vmul.f32 %v38, %v32
  %v41 = vmul.f32 %v39, %v33
  %v42 = vadd.f32 %v36, %v40
  %v43 = vadd.f32 %v37, %v41
  %v44 = vsub.f32 0.0, %v42
  %v45 = vsub.f32 0.0, %v43
  %v46 = vadd.f32 %v44, %v45
  %v47 = vld [vmem:[%s2] sm:$0xff]
  %v48 = vadd.f32 %v47, %v46
  %49 = vst [vmem:[%s2] sm:$0xff] %v48
  // Predicated region
  $region14: #{_voxel_loss_impl.1} parent=0 // pred_check
    %p50 = pneg %p11
  $region15: #{_voxel_loss_impl.1} parent=0 // pred_check_branch
    %52 = sbr.rel (%p50) target = $region17
  $region16: #{_voxel_loss_impl.1} parent=0 // pred_region
    %v53 = vld [vmem:[%s2] sm:$0xff]
    %54 = vadd.xlane.f32.xlu0 %v53
    %v55 = vpop.xlane.xlu0 %54
    %v56 = vrot.slane %v55, 4
    %v57 = vadd.f32 %v55, %v56
    %v58 = vrot.slane %v57, 2
    %v59 = vadd.f32 %v57, %v58
    %v60 = vrot.slane %v59, 1
    %v61 = vadd.f32 %v59, %v60
    %s62 = vtos %v61
    %v63 = vrcp.pop 2048.0
    %v64 = vmul.f32 2048.0, %v63
    %v65 = vsub.f32 1.0, %v64
    %v66 = vmul.f32 %v63, %v65
    %v67 = vadd.f32 %v63, %v66
    %vm68 = vweird.f32 %v63
    %v69 = vsel %vm68, %v63, %v67
    %s70 = vtos %v69
    %s71 = smul.f32 %s62, %s70
    %v72 = vstv %s71
    %73 = vst [vmem:[%s2] sm:$0xff] %v72
  $region17: #{_voxel_loss_impl.1} parent=0 // pred_fallthru
    _
  // Predicated region
  $region18: #{_voxel_loss_impl.1} parent=0 // pred_check
    _
  $region19: #{_voxel_loss_impl.1} parent=0 // pred_check_branch
    %75 = sbr.rel (0) target = $region21
  $region20: #{_voxel_loss_impl.1} parent=0 // pred_region
    _
  $region21: #{_voxel_loss_impl.1} parent=0 // pred_fallthru
    _
  // Predicated region
  $region22: #{_voxel_loss_impl.1} parent=0 // pred_check
    _
  $region23: #{_voxel_loss_impl.1} parent=0 // pred_check_branch
    %77 = sbr.rel (0) target = $region25
  $region24: #{_voxel_loss_impl.1} parent=0 // pred_region
    _
  $region25: #{_voxel_loss_impl.1} parent=0 // pred_fallthru
    _

</llo_original>
